<compile_context>
chip_gen: v7x
topology: tpu7x:2x2x1
jax: 0.10.0
libtpu: 0.0.40
codegen_flags: <defaults>
</compile_context>

<pallas_src>
import functools

import numpy as np
import jax
import jax.numpy as jnp
from jax.experimental import pallas as pl
from jax.experimental.pallas import tpu as pltpu


# ----------------------------------------------------------------------------
# Feature probe: stride-0 sublane-broadcast loads (pl.ds(start, size, stride=0)).
# ----------------------------------------------------------------------------
_STRIDE0_OK = None


def _stride0_supported():
    """Probe whether ref[pl.ds(c, rows, stride=0), :] broadcast-loads a row."""
    global _STRIDE0_OK
    if _STRIDE0_OK is None:
        def probe_kernel(x_ref, o_ref):
            o_ref[...] = x_ref[pl.ds(1, 8, stride=0), :]

        try:
            x = jnp.arange(4 * 128, dtype=jnp.float32).reshape(4, 128)
            out = jax.block_until_ready(
                pl.pallas_call(
                    probe_kernel,
                    out_shape=jax.ShapeDtypeStruct((8, 128), jnp.float32),
                )(x))
            _STRIDE0_OK = bool(
                np.allclose(np.asarray(out),
                            np.broadcast_to(np.asarray(x)[1:2, :], (8, 128))))
        except Exception:
            _STRIDE0_OK = False
    return _STRIDE0_OK


# ----------------------------------------------------------------------------
# Pallas kernel: fused attention gate over a (C, TN) spatial tile.
# ----------------------------------------------------------------------------
def _load_channel_bcast(ref, c, rows, use_stride0):
    """Channel row ref[c, :] broadcast to (rows, TN), in f32.

    f32 + stride-0 supported: the vld slot does the sublane broadcast for free.
    Otherwise (bf16 streaming / unsupported): load once, upcast, broadcast on
    the VPU (still cheap; the kernel is HBM-bound).
    """
    if use_stride0 and ref.dtype == jnp.float32:
        return ref[pl.ds(c, rows, stride=0), :]
    row = ref[c:c + 1, :].astype(jnp.float32)
    return jnp.broadcast_to(row, (rows, row.shape[-1]))


def attention_gate_kernel(g_ref, x_ref, wg_ref, wx_ref, bh_ref, wp_ref, bp_ref,
                          out_ref, *, use_stride0):
    F_int, F_g = wg_ref.shape
    F_l = wx_ref.shape[1]

    if F_int * max(F_g, F_l) <= 256:
        # Tiny channel counts: unrolled VPU MACs; the per-channel input rows are
        # pulled out of the vector-load slot already broadcast to F_int sublanes.
        wg = wg_ref[...]
        wx = wx_ref[...]
        acc = wg[:, 0:1] * _load_channel_bcast(g_ref, 0, F_int, use_stride0)
        for c in range(1, F_g):
            acc = acc + wg[:, c:c + 1] * _load_channel_bcast(g_ref, c, F_int,
                                                             use_stride0)
        for c in range(F_l):
            acc = acc + wx[:, c:c + 1] * _load_channel_bcast(x_ref, c, F_int,
                                                             use_stride0)
    else:
        # TODO(synk): at real U-Net channel counts (F_int >= 128) tile the
        # contraction to MXU-friendly 128/256 multiples and stream bf16 operands.
        acc = (jnp.dot(wg_ref[...], g_ref[...].astype(jnp.float32),
                       preferred_element_type=jnp.float32)
               + jnp.dot(wx_ref[...], x_ref[...].astype(jnp.float32),
                         preferred_element_type=jnp.float32))

    # h = relu(W_g g + W_x x + (b_g + b_x))   (BN folded into W/b on the host)
    h = jnp.maximum(acc + bh_ref[...], 0.0)                    # (F_int, TN)

    # psi = sigmoid(w_psi . h + b_psi): fused multiply-reduce over sublanes,
    # sigmoid as a single EUP tanh on the lane-dense (1, TN) row.
    z = jnp.sum(h * wp_ref[...], axis=0, keepdims=True) + bp_ref[...]
    psi = 0.5 * jnp.tanh(0.5 * z) + 0.5                        # (1, TN)

    # out = x * psi (broadcast over the channel/sublane dim)
    out_ref[...] = (x_ref[...].astype(jnp.float32) * psi).astype(out_ref.dtype)


# ----------------------------------------------------------------------------
# pallas_call wrapper
# ----------------------------------------------------------------------------
def attention_block_pallas(g3, x3, wg, wx, b_h, wp, bp, *,
                           out_dtype=jnp.float32, tn, buffers=None):
    """g3: (N, F_g, HWp), x3: (N, F_l, HWp) with HWp a multiple of tn."""
    N, F_g, HWp = g3.shape
    _, F_l, _ = x3.shape
    F_int = wg.shape[0]
    assert HWp % tn == 0 and tn % 128 == 0
    n_tiles = HWp // tn

    def gx_spec(C):
        kw = {}
        if buffers is not None:              # e.g. buffers=3 on v7x (3.2 TB/s HBM)
            kw["pipeline_mode"] = pl.Buffered(buffers)
        return pl.BlockSpec((None, C, tn), lambda n, j: (n, 0, j), **kw)

    kernel = functools.partial(attention_gate_kernel,
                               use_stride0=_stride0_supported())

    return pl.pallas_call(
        kernel,
        out_shape=jax.ShapeDtypeStruct((N, F_l, HWp), out_dtype),
        grid_spec=pltpu.PrefetchScalarGridSpec(
            num_scalar_prefetch=0,
            grid=(N, n_tiles),
            in_specs=[
                gx_spec(F_g),                                        # g tile
                gx_spec(F_l),                                        # x tile
                pl.BlockSpec((F_int, F_g), lambda n, j: (0, 0)),     # W_g
                pl.BlockSpec((F_int, F_l), lambda n, j: (0, 0)),     # W_x
                pl.BlockSpec((F_int, 1), lambda n, j: (0, 0)),       # b_g + b_x
                pl.BlockSpec((F_int, 1), lambda n, j: (0, 0)),       # w_psi
                pl.BlockSpec((1, 1), lambda n, j: (0, 0)),           # b_psi
            ],
            out_specs=pl.BlockSpec((None, F_l, tn), lambda n, j: (n, 0, j)),
        ),
        compiler_params=pltpu.CompilerParams(
            dimension_semantics=("parallel", "parallel"),
            vmem_limit_bytes=32 * 1024 * 1024),
    )(g3, x3, wg, wx, b_h, wp, bp)


# ----------------------------------------------------------------------------
# Glue: BN folding, tile choice, free NCHW <-> (N, C, HW) reshapes.
# ----------------------------------------------------------------------------
_TN_TARGET_BYTES = 1 << 20   # >= ~1 MiB per (8-sublane) input block ~ 85% roofline


def _choose_tile(hw, stream_dtype):
    """Lane tile: multiple of 128, sized so one 8-sublane block is ~1 MiB."""
    itemsize = jnp.dtype(stream_dtype).itemsize
    tn = max(128, (_TN_TARGET_BYTES // (8 * itemsize)) // 128 * 128)
    hw128 = -(-hw // 128) * 128
    return min(tn, hw128)


def fold_bn(w, b, gamma, beta, mean, var, eps=1e-5):
    """Fold eval-mode BatchNorm into a 1x1 conv. w: (C_out, C_in), b: (C_out,)."""
    scale = gamma / jnp.sqrt(var + eps)
    return w * scale[:, None], (b - mean) * scale + beta


def make_params(key, F_g, F_l, F_int):
    ks = jax.random.split(key, 9)
    p = {}
    # Conv2d weights stored (C_out, C_in), matching PyTorch (C_out, C_in, 1, 1).
    p["wg"] = jax.random.normal(ks[0], (F_int, F_g), jnp.float32) * 0.2
    p["bg"] = jax.random.normal(ks[1], (F_int,), jnp.float32) * 0.1
    p["wx"] = jax.random.normal(ks[2], (F_int, F_l), jnp.float32) * 0.2
    p["bx"] = jax.random.normal(ks[3], (F_int,), jnp.float32) * 0.1
    p["wp"] = jax.random.normal(ks[4], (1, F_int), jnp.float32) * 0.2
    p["bp"] = jax.random.normal(ks[5], (1,), jnp.float32) * 0.1

    def bn(k, c):
        k1, k2, k3, k4 = jax.random.split(k, 4)
        return dict(
            gamma=1.0 + 0.1 * jax.random.normal(k1, (c,), jnp.float32),
            beta=0.1 * jax.random.normal(k2, (c,), jnp.float32),
            mean=0.1 * jax.random.normal(k3, (c,), jnp.float32),
            var=0.5 + jnp.abs(jax.random.normal(k4, (c,), jnp.float32)),
        )
    p["bn_g"] = bn(ks[6], F_int)
    p["bn_x"] = bn(ks[7], F_int)
    p["bn_p"] = bn(ks[8], 1)
    return p


def attention_block_forward(g_nchw, x_nchw, params, *,
                            stream_dtype=jnp.float32, out_dtype=None,
                            buffers=None):
    """stream_dtype=jnp.bfloat16 halves HBM traffic on v6e/v7x (math stays f32).
    buffers=3 deepens the input pipeline (recommended on v7x)."""
    N, F_g, H, W = g_nchw.shape
    _, F_l, _, _ = x_nchw.shape
    HW = H * W
    if out_dtype is None:
        out_dtype = x_nchw.dtype

    # Fold eval-mode BN into each 1x1 conv; pre-sum the W_g / W_x biases.
    wg, bg = fold_bn(params["wg"], params["bg"], **params["bn_g"])
    wx, bx = fold_bn(params["wx"], params["bx"], **params["bn_x"])
    wp, bp = fold_bn(params["wp"], params["bp"], **params["bn_p"])
    b_h = (bg + bx).reshape(-1, 1)          # (F_int, 1)
    wp_col = wp.reshape(-1, 1)              # (F_int, 1)
    bp_sc = bp.reshape(1, 1)                # (1, 1)

    # Channel-major, spatial-in-lanes layout: free reshapes, no transposes.
    g3 = g_nchw.reshape(N, F_g, HW).astype(stream_dtype)
    x3 = x_nchw.reshape(N, F_l, HW).astype(stream_dtype)

    # Pad H*W up to a multiple of the (byte-sized) tile rather than shrinking
    # the tile to a divisor of H*W: avoids the TN=128 ~3x perf cliff.
    tn = _choose_tile(HW, stream_dtype)
    hw_pad = -(-HW // tn) * tn
    if hw_pad != HW:
        g3 = jnp.pad(g3, ((0, 0), (0, 0), (0, hw_pad - HW)))
        x3 = jnp.pad(x3, ((0, 0), (0, 0), (0, hw_pad - HW)))

    out3 = attention_block_pallas(g3, x3, wg, wx, b_h, wp_col, bp_sc,
                                  out_dtype=out_dtype, tn=tn, buffers=buffers)
    if hw_pad != HW:
        out3 = out3[:, :, :HW]
    return out3.reshape(N, F_l, H, W)


def attention_block_ref(g_nchw, x_nchw, params):
    """Pure-JAX reference (same eval-mode BN semantics)."""
    wg, bg = fold_bn(params["wg"], params["bg"], **params["bn_g"])
    wx, bx = fold_bn(params["wx"], params["bx"], **params["bn_x"])
    wp, bp = fold_bn(params["wp"], params["bp"], **params["bn_p"])
    g1 = jnp.einsum("fc,nchw->nfhw", wg, g_nchw) + bg[None, :, None, None]
    x1 = jnp.einsum("fc,nchw->nfhw", wx, x_nchw) + bx[None, :, None, None]
    h = jnp.maximum(g1 + x1, 0.0)
    psi = jnp.einsum("fc,nchw->nfhw", wp, h) + bp[None, :, None, None]
    psi = jax.nn.sigmoid(psi)
    return x_nchw * psi


if __name__ == "__main__":
    N, F_g, F_l, F_int, H, W = 2, 4, 4, 8, 16, 16

    key = jax.random.PRNGKey(0)
    kg, kx, kp = jax.random.split(key, 3)
    g = jax.random.normal(kg, (N, F_g, H, W), jnp.float32)
    x = jax.random.normal(kx, (N, F_l, H, W), jnp.float32)
    params = make_params(kp, F_g, F_l, F_int)

    ref = jax.block_until_ready(attention_block_ref(g, x, params))

    # f32 streaming path: strict check against the reference.
    out = jax.block_until_ready(attention_block_forward(g, x, params))
    np.testing.assert_allclose(np.asarray(out), np.asarray(ref),
                               rtol=1e-5, atol=1e-5)

    # bf16 streaming path (the v6e/v7x HBM-traffic win): relaxed tolerance.
    out_bf16 = jax.block_until_ready(
        attention_block_forward(g, x, params, stream_dtype=jnp.bfloat16))
    np.testing.assert_allclose(np.asarray(out_bf16), np.asarray(ref),
                               rtol=5e-2, atol=5e-2)

    print("KERNEL_OK")
</pallas_src>

<mosaic_0001>
module attributes {stable_mosaic.version = 11 : i64} {
  func.func @probe_kernel(%arg0: memref<4x128xf32, #tpu.memory_space<vmem>>, %arg1: memref<8x128xf32, #tpu.memory_space<vmem>>) attributes {dimension_semantics = [], scalar_prefetch = 0 : i64, scratch_operands = 0 : i64, tpu.core_type = #tpu.core_type<tc>} {
    %c1 = arith.constant 1 : index
    %c0 = arith.constant 0 : index
    %0 = tpu.strided_load %arg0[%c1, %c0] {strides = array<i32: 0, 1>} : memref<4x128xf32, #tpu.memory_space<vmem>>, vector<8x128xf32>
    %c0_0 = arith.constant 0 : index
    %c0_1 = arith.constant 0 : index
    %1 = vector.load %arg1[%c0_0, %c0_1] : memref<8x128xf32, #tpu.memory_space<vmem>>, vector<8x128xf32>
    tpu.vector_store %arg1[%c0_0, %c0_1], %0 {strides = array<i32>} : memref<8x128xf32, #tpu.memory_space<vmem>>, vector<8x128xf32>,
    return
  }
}

module attributes {stable_mosaic.version = 11 : i64} {
  func.func @attention_gate_kernel(%arg0: i32, %arg1: i32, %arg2: memref<1x4x256xf32, #tpu.memory_space<vmem>>, %arg3: memref<1x4x256xf32, #tpu.memory_space<vmem>>, %arg4: memref<8x4xf32, #tpu.memory_space<vmem>>, %arg5: memref<8x4xf32, #tpu.memory_space<vmem>>, %arg6: memref<8x1xf32, #tpu.memory_space<vmem>>, %arg7: memref<8x1xf32, #tpu.memory_space<vmem>>, %arg8: memref<1x1xf32, #tpu.memory_space<vmem>>, %arg9: memref<1x4x256xf32, #tpu.memory_space<vmem>>) attributes {dimension_semantics = [#tpu.dimension_semantics<parallel>, #tpu.dimension_semantics<parallel>], iteration_bounds = array<i64: 2, 1>, scalar_prefetch = 0 : i64, scratch_operands = 0 : i64, tpu.core_type = #tpu.core_type<tc>, window_params = [{transform_indices = @transform_0, window_bounds = array<i64: 1, 4, 256>}, {transform_indices = @transform_1, window_bounds = array<i64: 1, 4, 256>}, {pipeline_mode = #tpu.pipeline_mode<synchronous>, transform_indices = @transform_2, window_bounds = array<i64: 8, 4>}, {pipeline_mode = #tpu.pipeline_mode<synchronous>, transform_indices = @transform_3, window_bounds = array<i64: 8, 4>}, {pipeline_mode = #tpu.pipeline_mode<synchronous>, transform_indices = @transform_4, window_bounds = array<i64: 8, 1>}, {pipeline_mode = #tpu.pipeline_mode<synchronous>, transform_indices = @transform_5, window_bounds = array<i64: 8, 1>}, {pipeline_mode = #tpu.pipeline_mode<synchronous>, transform_indices = @transform_6, window_bounds = array<i64: 1, 1>}, {transform_indices = @transform_7, window_bounds = array<i64: 1, 4, 256>}]} {
    %c0 = arith.constant 0 : index
    %c0_0 = arith.constant 0 : index
    %0 = vector.load %arg4[%c0, %c0_0] : memref<8x4xf32, #tpu.memory_space<vmem>>, vector<8x4xf32>
    %c0_1 = arith.constant 0 : index
    %c0_2 = arith.constant 0 : index
    %1 = vector.load %arg5[%c0_1, %c0_2] : memref<8x4xf32, #tpu.memory_space<vmem>>, vector<8x4xf32>
    %2 = vector.extract_strided_slice %0 {offsets = [0, 0], sizes = [8, 1], strides = [1, 1]} : vector<8x4xf32> to vector<8x1xf32>
    %c0_3 = arith.constant 0 : index
    %c0_4 = arith.constant 0 : index
    %c0_5 = arith.constant 0 : index
    %3 = vector.load %arg2[%c0_3, %c0_4, %c0_5] : memref<1x4x256xf32, #tpu.memory_space<vmem>>, vector<1x1x256xf32>
    %4 = vector.shape_cast %3 : vector<1x1x256xf32> to vector<1x256xf32>
    %5 = vector.shape_cast %4 : vector<1x256xf32> to vector<1x256xf32>
    %6 = vector.broadcast %5 : vector<1x256xf32> to vector<8x256xf32>
    %7 = vector.broadcast %2 : vector<8x1xf32> to vector<8x256xf32>
    %8 = arith.mulf %7, %6 : vector<8x256xf32>
    %9 = vector.extract_strided_slice %0 {offsets = [0, 1], sizes = [8, 1], strides = [1, 1]} : vector<8x4xf32> to vector<8x1xf32>
    %c0_6 = arith.constant 0 : index
    %c1 = arith.constant 1 : index
    %c0_7 = arith.constant 0 : index
    %10 = vector.load %arg2[%c0_6, %c1, %c0_7] : memref<1x4x256xf32, #tpu.memory_space<vmem>>, vector<1x1x256xf32>
    %11 = vector.shape_cast %10 : vector<1x1x256xf32> to vector<1x256xf32>
    %12 = vector.shape_cast %11 : vector<1x256xf32> to vector<1x256xf32>
    %13 = vector.broadcast %12 : vector<1x256xf32> to vector<8x256xf32>
    %14 = vector.broadcast %9 : vector<8x1xf32> to vector<8x256xf32>
    %15 = arith.mulf %14, %13 : vector<8x256xf32>
    %16 = arith.addf %8, %15 : vector<8x256xf32>
    %17 = vector.extract_strided_slice %0 {offsets = [0, 2], sizes = [8, 1], strides = [1, 1]} : vector<8x4xf32> to vector<8x1xf32>
    %c0_8 = arith.constant 0 : index
    %c2 = arith.constant 2 : index
    %c0_9 = arith.constant 0 : index
    %18 = vector.load %arg2[%c0_8, %c2, %c0_9] : memref<1x4x256xf32, #tpu.memory_space<vmem>>, vector<1x1x256xf32>
    %19 = vector.shape_cast %18 : vector<1x1x256xf32> to vector<1x256xf32>
    %20 = vector.shape_cast %19 : vector<1x256xf32> to vector<1x256xf32>
    %21 = vector.broadcast %20 : vector<1x256xf32> to vector<8x256xf32>
    %22 = vector.broadcast %17 : vector<8x1xf32> to vector<8x256xf32>
    %23 = arith.mulf %22, %21 : vector<8x256xf32>
    %24 = arith.addf %16, %23 : vector<8x256xf32>
    %25 = vector.extract_strided_slice %0 {offsets = [0, 3], sizes = [8, 1], strides = [1, 1]} : vector<8x4xf32> to vector<8x1xf32>
    %c0_10 = arith.constant 0 : index
    %c3 = arith.constant 3 : index
    %c0_11 = arith.constant 0 : index
    %26 = vector.load %arg2[%c0_10, %c3, %c0_11] : memref<1x4x256xf32, #tpu.memory_space<vmem>>, vector<1x1x256xf32>
    %27 = vector.shape_cast %26 : vector<1x1x256xf32> to vector<1x256xf32>
    %28 = vector.shape_cast %27 : vector<1x256xf32> to vector<1x256xf32>
    %29 = vector.broadcast %28 : vector<1x256xf32> to vector<8x256xf32>
    %30 = vector.broadcast %25 : vector<8x1xf32> to vector<8x256xf32>
    %31 = arith.mulf %30, %29 : vector<8x256xf32>
    %32 = arith.addf %24, %31 : vector<8x256xf32>
    %33 = vector.extract_strided_slice %1 {offsets = [0, 0], sizes = [8, 1], strides = [1, 1]} : vector<8x4xf32> to vector<8x1xf32>
    %c0_12 = arith.constant 0 : index
    %c0_13 = arith.constant 0 : index
    %c0_14 = arith.constant 0 : index
    %34 = vector.load %arg3[%c0_12, %c0_13, %c0_14] : memref<1x4x256xf32, #tpu.memory_space<vmem>>, vector<1x1x256xf32>
    %35 = vector.shape_cast %34 : vector<1x1x256xf32> to vector<1x256xf32>
    %36 = vector.shape_cast %35 : vector<1x256xf32> to vector<1x256xf32>
    %37 = vector.broadcast %36 : vector<1x256xf32> to vector<8x256xf32>
    %38 = vector.broadcast %33 : vector<8x1xf32> to vector<8x256xf32>
    %39 = arith.mulf %38, %37 : vector<8x256xf32>
    %40 = arith.addf %32, %39 : vector<8x256xf32>
    %41 = vector.extract_strided_slice %1 {offsets = [0, 1], sizes = [8, 1], strides = [1, 1]} : vector<8x4xf32> to vector<8x1xf32>
    %c0_15 = arith.constant 0 : index
    %c1_16 = arith.constant 1 : index
    %c0_17 = arith.constant 0 : index
    %42 = vector.load %arg3[%c0_15, %c1_16, %c0_17] : memref<1x4x256xf32, #tpu.memory_space<vmem>>, vector<1x1x256xf32>
    %43 = vector.shape_cast %42 : vector<1x1x256xf32> to vector<1x256xf32>
    %44 = vector.shape_cast %43 : vector<1x256xf32> to vector<1x256xf32>
    %45 = vector.broadcast %44 : vector<1x256xf32> to vector<8x256xf32>
    %46 = vector.broadcast %41 : vector<8x1xf32> to vector<8x256xf32>
    %47 = arith.mulf %46, %45 : vector<8x256xf32>
    %48 = arith.addf %40, %47 : vector<8x256xf32>
    %49 = vector.extract_strided_slice %1 {offsets = [0, 2], sizes = [8, 1], strides = [1, 1]} : vector<8x4xf32> to vector<8x1xf32>
    %c0_18 = arith.constant 0 : index
    %c2_19 = arith.constant 2 : index
    %c0_20 = arith.constant 0 : index
    %50 = vector.load %arg3[%c0_18, %c2_19, %c0_20] : memref<1x4x256xf32, #tpu.memory_space<vmem>>, vector<1x1x256xf32>
    %51 = vector.shape_cast %50 : vector<1x1x256xf32> to vector<1x256xf32>
    %52 = vector.shape_cast %51 : vector<1x256xf32> to vector<1x256xf32>
    %53 = vector.broadcast %52 : vector<1x256xf32> to vector<8x256xf32>
    %54 = vector.broadcast %49 : vector<8x1xf32> to vector<8x256xf32>
    %55 = arith.mulf %54, %53 : vector<8x256xf32>
    %56 = arith.addf %48, %55 : vector<8x256xf32>
    %57 = vector.extract_strided_slice %1 {offsets = [0, 3], sizes = [8, 1], strides = [1, 1]} : vector<8x4xf32> to vector<8x1xf32>
    %c0_21 = arith.constant 0 : index
    %c3_22 = arith.constant 3 : index
    %c0_23 = arith.constant 0 : index
    %58 = vector.load %arg3[%c0_21, %c3_22, %c0_23] : memref<1x4x256xf32, #tpu.memory_space<vmem>>, vector<1x1x256xf32>
    %59 = vector.shape_cast %58 : vector<1x1x256xf32> to vector<1x256xf32>
    %60 = vector.shape_cast %59 : vector<1x256xf32> to vector<1x256xf32>
    %61 = vector.broadcast %60 : vector<1x256xf32> to vector<8x256xf32>
    %62 = vector.broadcast %57 : vector<8x1xf32> to vector<8x256xf32>
    %63 = arith.mulf %62, %61 : vector<8x256xf32>
    %64 = arith.addf %56, %63 : vector<8x256xf32>
    %c0_24 = arith.constant 0 : index
    %c0_25 = arith.constant 0 : index
    %65 = vector.load %arg6[%c0_24, %c0_25] : memref<8x1xf32, #tpu.memory_space<vmem>>, vector<8x1xf32>
    %66 = vector.broadcast %65 : vector<8x1xf32> to vector<8x256xf32>
    %67 = arith.addf %64, %66 : vector<8x256xf32>
    %cst = arith.constant 0.000000e+00 : f32
    %68 = vector.broadcast %cst : f32 to vector<8x256xf32>
    %69 = arith.maximumf %67, %68 : vector<8x256xf32>
    %c0_26 = arith.constant 0 : index
    %c0_27 = arith.constant 0 : index
    %70 = vector.load %arg7[%c0_26, %c0_27] : memref<8x1xf32, #tpu.memory_space<vmem>>, vector<8x1xf32>
    %71 = vector.broadcast %70 : vector<8x1xf32> to vector<8x256xf32>
    %72 = arith.mulf %69, %71 : vector<8x256xf32>
    %cst_28 = arith.constant dense<0.000000e+00> : vector<256xf32>
    %73 = vector.multi_reduction <add>, %72, %cst_28 [0] : vector<8x256xf32> to vector<256xf32>
    %74 = vector.shape_cast %73 : vector<256xf32> to vector<1x256xf32>
    %c0_29 = arith.constant 0 : index
    %c0_30 = arith.constant 0 : index
    %75 = vector.load %arg8[%c0_29, %c0_30] : memref<1x1xf32, #tpu.memory_space<vmem>>, vector<1x1xf32>
    %76 = vector.broadcast %75 : vector<1x1xf32> to vector<1x256xf32>
    %77 = arith.addf %74, %76 : vector<1x256xf32>
    %cst_31 = arith.constant 5.000000e-01 : f32
    %78 = vector.broadcast %cst_31 : f32 to vector<1x256xf32>
    %79 = arith.mulf %78, %77 : vector<1x256xf32>
    %80 = math.tanh %79 : vector<1x256xf32>
    %cst_32 = arith.constant 5.000000e-01 : f32
    %81 = vector.broadcast %cst_32 : f32 to vector<1x256xf32>
    %82 = arith.mulf %81, %80 : vector<1x256xf32>
    %cst_33 = arith.constant 5.000000e-01 : f32
    %83 = vector.broadcast %cst_33 : f32 to vector<1x256xf32>
    %84 = arith.addf %82, %83 : vector<1x256xf32>
    %c0_34 = arith.constant 0 : index
    %c0_35 = arith.constant 0 : index
    %c0_36 = arith.constant 0 : index
    %85 = vector.load %arg3[%c0_34, %c0_35, %c0_36] : memref<1x4x256xf32, #tpu.memory_space<vmem>>, vector<1x4x256xf32>
    %86 = vector.shape_cast %85 : vector<1x4x256xf32> to vector<4x256xf32>
    %87 = vector.broadcast %84 : vector<1x256xf32> to vector<4x256xf32>
    %88 = arith.mulf %86, %87 : vector<4x256xf32>
    %c0_37 = arith.constant 0 : index
    %c0_38 = arith.constant 0 : index
    %c0_39 = arith.constant 0 : index
    %89 = vector.load %arg9[%c0_37, %c0_38, %c0_39] : memref<1x4x256xf32, #tpu.memory_space<vmem>>, vector<1x4x256xf32>
    %90 = vector.shape_cast %89 : vector<1x4x256xf32> to vector<4x256xf32>
    %91 = vector.shape_cast %88 : vector<4x256xf32> to vector<1x4x256xf32>
    tpu.vector_store %arg9[%c0_37, %c0_38, %c0_39], %91 {strides = array<i32>} : memref<1x4x256xf32, #tpu.memory_space<vmem>>, vector<1x4x256xf32>,
    return
  }
  func.func @transform_0(%arg0: i32, %arg1: i32) -> (i32, i32, i32) {
    %c0_i32 = arith.constant 0 : i32
    %c0_i32_0 = arith.constant 0 : i32
    return %arg0, %c0_i32, %arg1 : i32, i32, i32
  }
  func.func @transform_1(%arg0: i32, %arg1: i32) -> (i32, i32, i32) {
    %c0_i32 = arith.constant 0 : i32
    %c0_i32_0 = arith.constant 0 : i32
    return %arg0, %c0_i32, %arg1 : i32, i32, i32
  }
  func.func @transform_2(%arg0: i32, %arg1: i32) -> (i32, i32) {
    %c0_i32 = arith.constant 0 : i32
    %c0_i32_0 = arith.constant 0 : i32
    %c0_i32_1 = arith.constant 0 : i32
    return %c0_i32, %c0_i32_0 : i32, i32
  }
  func.func @transform_3(%arg0: i32, %arg1: i32) -> (i32, i32) {
    %c0_i32 = arith.constant 0 : i32
    %c0_i32_0 = arith.constant 0 : i32
    %c0_i32_1 = arith.constant 0 : i32
    return %c0_i32, %c0_i32_0 : i32, i32
  }
  func.func @transform_4(%arg0: i32, %arg1: i32) -> (i32, i32) {
    %c0_i32 = arith.constant 0 : i32
    %c0_i32_0 = arith.constant 0 : i32
    %c0_i32_1 = arith.constant 0 : i32
    return %c0_i32, %c0_i32_0 : i32, i32
  }
  func.func @transform_5(%arg0: i32, %arg1: i32) -> (i32, i32) {
    %c0_i32 = arith.constant 0 : i32
    %c0_i32_0 = arith.constant 0 : i32
    %c0_i32_1 = arith.constant 0 : i32
    return %c0_i32, %c0_i32_0 : i32, i32
  }
  func.func @transform_6(%arg0: i32, %arg1: i32) -> (i32, i32) {
    %c0_i32 = arith.constant 0 : i32
    %c0_i32_0 = arith.constant 0 : i32
    %c0_i32_1 = arith.constant 0 : i32
    return %c0_i32, %c0_i32_0 : i32, i32
  }
  func.func @transform_7(%arg0: i32, %arg1: i32) -> (i32, i32, i32) {
    %c0_i32 = arith.constant 0 : i32
    %c0_i32_0 = arith.constant 0 : i32
    return %arg0, %c0_i32, %arg1 : i32, i32, i32
  }
}

</mosaic_0001>

<llo_original>
// kernel: tpu_custom_call.1
$region0: #{tpu_custom_call.1}
  #allocation0 [shape = 'u32[]', space=smem, size = 0x4, offset = 0x4, fixed_abs, tag = 'smem constant byte address 0x4 - core index']
  #allocation1 [shape = 'u32[144,128]{1,0:T(1,128)}', space=vmem, size = 0x12000, scoped, tag = 'internal scratch']
  %s0 = inlined_call_operand.hbm [shape: f32[4,128], index: 0, kind: input, shape index: {}]
  %s1 = inlined_call_operand.hbm [shape: f32[8,128], index: 1, kind: output, shape index: {}]
  %s2 = sld [smem:[#allocation0]]
  $region18: #{tpu_custom_call.1} parent=0
    _
  %s4 = ssub.s32 1, %s2
  %s5 = scalar_select 0, %s4, %s2
  $region1: #{tpu_custom_call.1} parent=0
    #allocation2 [shape = 'u8[2048]{0}', space=vmem, size = 0x800, scoped, tag = 'input window, operand 0, single buffered']
    #allocation3 [shape = 's32[1]{0}', space=sflag, size = 0x4, scoped, tag = 'scoped memory for tpu_custom_call.1']
    #allocation4 [shape = 's32[1]{0}', space=sflag, size = 0x4, scoped, tag = 'scoped memory for tpu_custom_call.1']
    #allocation5 [shape = 'u8[4096]{0}', space=vmem, size = 0x1000, scoped, tag = 'output window, operand 0, single buffered']
    %6 = vsyncpa [#allocation3], 0
    %7 = vsyncpa [#allocation4], 0
    // Predicated region
    $region2: #{tpu_custom_call.1} parent=1 // pred_check
      _
    $region3: #{tpu_custom_call.1} parent=1 // pred_check_branch
      %9 = sbr.rel (0) target = $region5
    $region4: #{tpu_custom_call.1} parent=1 // pred_region
      %s11 = ssub.s32 64, 64
      %12 = vsyncadd [#allocation3], %s11
      %s14 = sshll.u32 [#allocation2], 4
      %s15 = int_to_ptr.vmem [resolvable:$true] %s14
      %17 = dma.hbm_to_vmem [thread:$0]  %s0, 64, %s15, [#allocation3]
    $region5: #{tpu_custom_call.1} parent=1 // pred_fallthru
      _
    // Predicated region
    $region6: #{tpu_custom_call.1} parent=1 // pred_check
      _
    $region7: #{tpu_custom_call.1} parent=1 // pred_check_branch
      %19 = sbr.rel (0) target = $region9
    $region8: #{tpu_custom_call.1} parent=1 // pred_region
      %20 = dma.done [#allocation3], 64
    $region9: #{tpu_custom_call.1} parent=1 // pred_fallthru
      _
    %v21 = vld [vmem:[#allocation2 + $0x1] ss:$0 sm:$0xff]
    %22 = vst [vmem:[#allocation5] sm:$0xff] %v21
    // Predicated region
    $region10: #{tpu_custom_call.1} parent=1 // pred_check
      _
    $region11: #{tpu_custom_call.1} parent=1 // pred_check_branch
      %24 = sbr.rel (0) target = $region13
    $region12: #{tpu_custom_call.1} parent=1 // pred_region
      %s26 = ssub.s32 128, 128
      %27 = vsyncadd [#allocation4], %s26
      %s29 = sshll.u32 [#allocation5], 4
      %s30 = int_to_ptr.vmem [resolvable:$true] %s29
      %32 = dma.vmem_to_hbm [thread:$0]  %s30, 128, %s1, [#allocation4]
    $region13: #{tpu_custom_call.1} parent=1 // pred_fallthru
      _
    // Predicated region
    $region14: #{tpu_custom_call.1} parent=1 // pred_check
      _
    $region15: #{tpu_custom_call.1} parent=1 // pred_check_branch
      %34 = sbr.rel (0) target = $region17
    $region16: #{tpu_custom_call.1} parent=1 // pred_region
      %35 = dma.done [#allocation4], 128
    $region17: #{tpu_custom_call.1} parent=1 // pred_fallthru
      _
    %36 = vsyncpa [#allocation3], 1
    %37 = vsyncpa [#allocation4], 1

// kernel: tpu_custom_call.1
$region0: #{tpu_custom_call.1}
  #allocation0 [shape = 'u32[]', space=smem, size = 0x4, offset = 0x4, fixed_abs, tag = 'smem constant byte address 0x4 - core index']
  #allocation1 [shape = 'u32[144,128]{1,0:T(1,128)}', space=vmem, size = 0x12000, scoped, tag = 'internal scratch']
  #allocation2 [shape = 'f32[1,1]{1,0:T(1,128)S(1)}', space=vmem, size = 0x200, scoped, tag = 'scoped memory for tpu_custom_call.1']
  %s0 = inlined_call_operand.vmem [shape: f32[2,4,256], index: 0, kind: input, shape index: {}]
  %s1 = inlined_call_operand.vmem [shape: f32[2,4,256], index: 1, kind: input, shape index: {}]
  %s2 = inlined_call_operand.vmem [shape: f32[8,4], index: 2, kind: input, shape index: {}]
  %s3 = inlined_call_operand.vmem [shape: f32[8,4], index: 3, kind: input, shape index: {}]
  %s4 = inlined_call_operand.vmem [shape: f32[8,1], index: 4, kind: input, shape index: {}]
  %s5 = inlined_call_operand.vmem [shape: f32[8,1], index: 5, kind: input, shape index: {}]
  %s6 = inlined_call_operand.<no memory space> [shape: f32[1,1], index: 6, kind: input, shape index: {}]
  %s7 = inlined_call_operand.hbm [shape: f32[2,4,256], index: 7, kind: output, shape index: {}]
  %s8 = sld [smem:[#allocation0]]
  $region61: #{tpu_custom_call.1} parent=0
    _
  %s10 = ssub.s32 1, %s8
  %s11 = scalar_select 0, %s10, %s8
  %v12 = vstv %s6
  %13 = vst [vmem:[#allocation2] sm:$0x1] %v12
  $region1: #{tpu_custom_call.1} parent=0
    #allocation3 [shape = 'u8[8192]{0}', space=vmem, size = 0x2000, scoped, tag = 'output window, operand 0']
    #allocation4 [shape = 's32[2]{0}', space=sflag, size = 0x8, scoped, tag = 'scoped memory for tpu_custom_call.1']
    %14 = vsyncpa [#allocation4], 0
    %s15 = scalar_lea.sflag [#allocation4], 1
    %16 = vsyncpa %s15, 0
    loop: start=0, step=1, limit=4
    $region2: #{tpu_custom_call.1} parent=1 // loop_pre_header
      _
    $region3: #{tpu_custom_call.1} parent=1 // loop_header
      %s18 = sphi 0, %s22
      %p19 = scmp.ge.s32.totalorder %s18, 4
      %s25 = sphi 0, %s37
      %s26 = sphi 0, %s33
      %s27 = sphi 0, %s25
      %s28 = sphi 0, %s26
      %s29 = sphi 0, %s27
      %s30 = sphi 0, %s28
      %s42 = sphi 0, %s44
      %s45 = sphi 0, %s42
      %s46 = sphi 0, %s45
      %s62 = sphi 0, %s46
      %s70 = sphi 0, %s72
      %s73 = sphi 0, %s70
      %s74 = sphi 0, %s73
      %s90 = sphi 0, %s74
      %s94 = sphi 0, %s94
      %s96 = sphi 0, %s94
      %s97 = sphi 0, %s96
      %s111 = sphi 0, %s97
      %s115 = sphi 0, %s115
      %s117 = sphi 0, %s115
      %s118 = sphi 0, %s117
      %s132 = sphi 0, %s118
      %s136 = sphi 0, %s136
      %s138 = sphi 0, %s136
      %s139 = sphi 0, %s138
      %s153 = sphi 0, %s139
      %s157 = sphi 0, %s157
      %s159 = sphi 0, %s157
      %s160 = sphi 0, %s159
      %s174 = sphi 0, %s160
      %s178 = sphi 0, %s178
      %s180 = sphi 0, %s178
      %s181 = sphi 0, %s180
      %s195 = sphi 0, %s181
      %s203 = sphi 0, %s205
      %s206 = sphi 0, %s203
      %s207 = sphi 0, %s206
      %s223 = sphi 0, %s207
    $region4: #{tpu_custom_call.1} parent=1 // loop_header_branch
      %21 = sbr.rel (%p19) target = $region8
    $region5: #{tpu_custom_call.1} parent=1 // loop_body
      %s23 = ssub.s32 %s18, 1
      %s24 = ssub.s32 %s18, 2
      %s31 = sadd.s32 1, %s26
      %p32 = scmp.ge.s32.totalorder %s31, 1
      %s33 = scalar_select %p32, 0, %s31
      %s34 = sadd.s32 1, %s25
      %s35 = scalar_select %p32, %s34, %s25
      %p36 = scmp.ge.s32.totalorder %s35, 2
      %s37 = scalar_select %p36, 0, %s35
      %s38 = ssub.s32 %s25, %s37
      %s39 = ssub.s32 %s26, %s33
      %s40 = sor.u32 %s38, %s39
      %p41 = scmp.eq.s32.totalorder %s40, 0
      %s43 = sadd.s32 %s42, 1
      %s44 = scalar_select %p41, %s42, %s43
      %p47 = pneg %p41
      %p48 = scmp.eq.s32.totalorder %s18, 1
      %p49 = por %p47, %p48
      %p50 = scmp.ne.s32.totalorder %s42, %s45
      %p51 = scmp.eq.s32.totalorder %s18, 0
      %p52 = por %p50, %p51
      %p53 = scmp.ne.s32.totalorder %s42, %s45
      %p54 = scmp.eq.s32.totalorder %s23, 1
      %p55 = por %p53, %p54
      %p56 = scmp.ne.s32.totalorder %s45, %s46
      %p57 = scmp.eq.s32.totalorder %s23, 0
      %p58 = por %p56, %p57
      %p59 = scmp.ne.s32.totalorder %s45, %s46
      %p60 = scmp.eq.s32.totalorder %s24, 1
      %p61 = por %p59, %p60
      %p63 = scmp.ne.s32.totalorder %s46, %s62
      %p64 = scmp.eq.s32.totalorder %s24, 0
      %p65 = por %p63, %p64
      %s66 = ssub.s32 %s25, %s37
      %s67 = ssub.s32 %s26, %s33
      %s68 = sor.u32 %s66, %s67
      %p69 = scmp.eq.s32.totalorder %s68, 0
      %s71 = sadd.s32 %s70, 1
      %s72 = scalar_select %p69, %s70, %s71
      %p75 = pneg %p69
      %p76 = scmp.eq.s32.totalorder %s18, 1
      %p77 = por %p75, %p76
      %p78 = scmp.ne.s32.totalorder %s70, %s73
      %p79 = scmp.eq.s32.totalorder %s18, 0
      %p80 = por %p78, %p79
      %p81 = scmp.ne.s32.totalorder %s70, %s73
      %p82 = scmp.eq.s32.totalorder %s23, 1
      %p83 = por %p81, %p82
      %p84 = scmp.ne.s32.totalorder %s73, %s74
      %p85 = scmp.eq.s32.totalorder %s23, 0
      %p86 = por %p84, %p85
      %p87 = scmp.ne.s32.totalorder %s73, %s74
      %p88 = scmp.eq.s32.totalorder %s24, 1
      %p89 = por %p87, %p88
      %p91 = scmp.ne.s32.totalorder %s74, %s90
      %p92 = scmp.eq.s32.totalorder %s24, 0
      %p93 = por %p91, %p92
      %s95 = sadd.s32 %s94, 1
      %p98 = scmp.eq.s32.totalorder %s18, 1
      %p99 = scmp.ne.s32.totalorder %s94, %s96
      %p100 = scmp.eq.s32.totalorder %s18, 0
      %p101 = por %p99, %p100
      %p102 = scmp.ne.s32.totalorder %s94, %s96
      %p103 = scmp.eq.s32.totalorder %s23, 1
      %p104 = por %p102, %p103
      %p105 = scmp.ne.s32.totalorder %s96, %s97
      %p106 = scmp.eq.s32.totalorder %s23, 0
      %p107 = por %p105, %p106
      %p108 = scmp.ne.s32.totalorder %s96, %s97
      %p109 = scmp.eq.s32.totalorder %s24, 1
      %p110 = por %p108, %p109
      %p112 = scmp.ne.s32.totalorder %s97, %s111
      %p113 = scmp.eq.s32.totalorder %s24, 0
      %p114 = por %p112, %p113
      %s116 = sadd.s32 %s115, 1
      %p119 = scmp.eq.s32.totalorder %s18, 1
      %p120 = scmp.ne.s32.totalorder %s115, %s117
      %p121 = scmp.eq.s32.totalorder %s18, 0
      %p122 = por %p120, %p121
      %p123 = scmp.ne.s32.totalorder %s115, %s117
      %p124 = scmp.eq.s32.totalorder %s23, 1
      %p125 = por %p123, %p124
      %p126 = scmp.ne.s32.totalorder %s117, %s118
      %p127 = scmp.eq.s32.totalorder %s23, 0
      %p128 = por %p126, %p127
      %p129 = scmp.ne.s32.totalorder %s117, %s118
      %p130 = scmp.eq.s32.totalorder %s24, 1
      %p131 = por %p129, %p130
      %p133 = scmp.ne.s32.totalorder %s118, %s132
      %p134 = scmp.eq.s32.totalorder %s24, 0
      %p135 = por %p133, %p134
      %s137 = sadd.s32 %s136, 1
      %p140 = scmp.eq.s32.totalorder %s18, 1
      %p141 = scmp.ne.s32.totalorder %s136, %s138
      %p142 = scmp.eq.s32.totalorder %s18, 0
      %p143 = por %p141, %p142
      %p144 = scmp.ne.s32.totalorder %s136, %s138
      %p145 = scmp.eq.s32.totalorder %s23, 1
      %p146 = por %p144, %p145
      %p147 = scmp.ne.s32.totalorder %s138, %s139
      %p148 = scmp.eq.s32.totalorder %s23, 0
      %p149 = por %p147, %p148
      %p150 = scmp.ne.s32.totalorder %s138, %s139
      %p151 = scmp.eq.s32.totalorder %s24, 1
      %p152 = por %p150, %p151
      %p154 = scmp.ne.s32.totalorder %s139, %s153
      %p155 = scmp.eq.s32.totalorder %s24, 0
      %p156 = por %p154, %p155
      %s158 = sadd.s32 %s157, 1
      %p161 = scmp.eq.s32.totalorder %s18, 1
      %p162 = scmp.ne.s32.totalorder %s157, %s159
      %p163 = scmp.eq.s32.totalorder %s18, 0
      %p164 = por %p162, %p163
      %p165 = scmp.ne.s32.totalorder %s157, %s159
      %p166 = scmp.eq.s32.totalorder %s23, 1
      %p167 = por %p165, %p166
      %p168 = scmp.ne.s32.totalorder %s159, %s160
      %p169 = scmp.eq.s32.totalorder %s23, 0
      %p170 = por %p168, %p169
      %p171 = scmp.ne.s32.totalorder %s159, %s160
      %p172 = scmp.eq.s32.totalorder %s24, 1
      %p173 = por %p171, %p172
      %p175 = scmp.ne.s32.totalorder %s160, %s174
      %p176 = scmp.eq.s32.totalorder %s24, 0
      %p177 = por %p175, %p176
      %s179 = sadd.s32 %s178, 1
      %p182 = scmp.eq.s32.totalorder %s18, 1
      %p183 = scmp.ne.s32.totalorder %s178, %s180
      %p184 = scmp.eq.s32.totalorder %s18, 0
      %p185 = por %p183, %p184
      %p186 = scmp.ne.s32.totalorder %s178, %s180
      %p187 = scmp.eq.s32.totalorder %s23, 1
      %p188 = por %p186, %p187
      %p189 = scmp.ne.s32.totalorder %s180, %s181
      %p190 = scmp.eq.s32.totalorder %s23, 0
      %p191 = por %p189, %p190
      %p192 = scmp.ne.s32.totalorder %s180, %s181
      %p193 = scmp.eq.s32.totalorder %s24, 1
      %p194 = por %p192, %p193
      %p196 = scmp.ne.s32.totalorder %s181, %s195
      %p197 = scmp.eq.s32.totalorder %s24, 0
      %p198 = por %p196, %p197
      %s199 = ssub.s32 %s25, %s37
      %s200 = ssub.s32 %s26, %s33
      %s201 = sor.u32 %s199, %s200
      %p202 = scmp.eq.s32.totalorder %s201, 0
      %s204 = sadd.s32 %s203, 1
      %s205 = scalar_select %p202, %s203, %s204
      %p208 = pneg %p202
      %p209 = scmp.eq.s32.totalorder %s18, 1
      %p210 = por %p208, %p209
      %p211 = scmp.ne.s32.totalorder %s203, %s206
      %p212 = scmp.eq.s32.totalorder %s18, 0
      %p213 = por %p211, %p212
      %p214 = scmp.ne.s32.totalorder %s203, %s206
      %p215 = scmp.eq.s32.totalorder %s23, 1
      %p216 = por %p214, %p215
      %p217 = scmp.ne.s32.totalorder %s206, %s207
      %p218 = scmp.eq.s32.totalorder %s23, 0
      %p219 = por %p217, %p218
      %p220 = scmp.ne.s32.totalorder %s206, %s207
      %p221 = scmp.eq.s32.totalorder %s24, 1
      %p222 = por %p220, %p221
      %p224 = scmp.ne.s32.totalorder %s207, %s223
      %p225 = scmp.eq.s32.totalorder %s24, 0
      %p226 = por %p224, %p225
      %p227 = scmp.le.s32.totalorder 1, %s18
      %p228 = scmp.lt.s32.totalorder %s18, 3
      %p229 = pnand %p227, %p228
      %p230 = pneg %p229
      // Predicated region
      $region9: #{tpu_custom_call.1} parent=5 // pred_check
        _
      $region10: #{tpu_custom_call.1} parent=5 // pred_check_branch
        %232 = sbr.rel (%p229) target = $region12
      $region11: #{tpu_custom_call.1} parent=5 // pred_region
        %s233 = ssub.s32 %s18, 1
        // Predicated region
        $region13: #{tpu_custom_call.1} parent=11 // pred_check
          %p234 = pneg %p107
        $region14: #{tpu_custom_call.1} parent=11 // pred_check_branch
          %236 = sbr.rel (%p234) target = $region16
        $region15: #{tpu_custom_call.1} parent=11 // pred_region
          _
        $region16: #{tpu_custom_call.1} parent=11 // pred_fallthru
          _
        // Predicated region
        $region17: #{tpu_custom_call.1} parent=11 // pred_check
          %p237 = pneg %p128
        $region18: #{tpu_custom_call.1} parent=11 // pred_check_branch
          %239 = sbr.rel (%p237) target = $region20
        $region19: #{tpu_custom_call.1} parent=11 // pred_region
          _
        $region20: #{tpu_custom_call.1} parent=11 // pred_fallthru
          _
        // Predicated region
        $region21: #{tpu_custom_call.1} parent=11 // pred_check
          %p240 = pneg %p149
        $region22: #{tpu_custom_call.1} parent=11 // pred_check_branch
          %242 = sbr.rel (%p240) target = $region24
        $region23: #{tpu_custom_call.1} parent=11 // pred_region
          _
        $region24: #{tpu_custom_call.1} parent=11 // pred_fallthru
          _
        // Predicated region
        $region25: #{tpu_custom_call.1} parent=11 // pred_check
          %p243 = pneg %p170
        $region26: #{tpu_custom_call.1} parent=11 // pred_check_branch
          %245 = sbr.rel (%p243) target = $region28
        $region27: #{tpu_custom_call.1} parent=11 // pred_region
          _
        $region28: #{tpu_custom_call.1} parent=11 // pred_fallthru
          _
        // Predicated region
        $region29: #{tpu_custom_call.1} parent=11 // pred_check
          %p246 = pneg %p191
        $region30: #{tpu_custom_call.1} parent=11 // pred_check_branch
          %248 = sbr.rel (%p246) target = $region32
        $region31: #{tpu_custom_call.1} parent=11 // pred_region
          _
        $region32: #{tpu_custom_call.1} parent=11 // pred_fallthru
          _
      $region12: #{tpu_custom_call.1} parent=5 // pred_fallthru
        _
      %p249 = scmp.lt.s32.totalorder %s18, 2
      // Predicated region
      $region33: #{tpu_custom_call.1} parent=5 // pred_check
        %p250 = pneg %p249
      $region34: #{tpu_custom_call.1} parent=5 // pred_check_branch
        %252 = sbr.rel (%p250) target = $region36
      $region35: #{tpu_custom_call.1} parent=5 // pred_region
        // Predicated region
        $region37: #{tpu_custom_call.1} parent=35 // pred_check
          %p253 = pneg %p52
        $region38: #{tpu_custom_call.1} parent=35 // pred_check_branch
          %255 = sbr.rel (%p253) target = $region40
        $region39: #{tpu_custom_call.1} parent=35 // pred_region
          %s256 = smul.u32 2, %s26
          %p257 = scmp.lt.s32.totalorder %s25, 1
          %s258 = scalar_select %p257, %s25, 1
          %p259 = scmp.lt.s32.totalorder %s256, 1
          %s260 = scalar_select %p259, %s256, 1
          %s261 = smul.addr %s258, 2
          %s262 = sadd.s32 %s260, %s261
          %s263 = smul.addr %s262, 4
          %s264 = scalar_lea.vmem %s0, %s263
          %s265 = smul.u32 2, %s26
        $region40: #{tpu_custom_call.1} parent=35 // pred_fallthru
          _
        // Predicated region
        $region41: #{tpu_custom_call.1} parent=35 // pred_check
          %p266 = pneg %p80
        $region42: #{tpu_custom_call.1} parent=35 // pred_check_branch
          %268 = sbr.rel (%p266) target = $region44
        $region43: #{tpu_custom_call.1} parent=35 // pred_region
          %s269 = smul.u32 2, %s26
          %p270 = scmp.lt.s32.totalorder %s25, 1
          %s271 = scalar_select %p270, %s25, 1
          %p272 = scmp.lt.s32.totalorder %s269, 1
          %s273 = scalar_select %p272, %s269, 1
          %s274 = smul.addr %s271, 2
          %s275 = sadd.s32 %s273, %s274
          %s276 = smul.addr %s275, 4
          %s277 = scalar_lea.vmem %s1, %s276
          %s278 = smul.u32 2, %s26
        $region44: #{tpu_custom_call.1} parent=35 // pred_fallthru
          _
      $region36: #{tpu_custom_call.1} parent=5 // pred_fallthru
        _
      %p279 = scmp.le.s32.totalorder 1, %s18
      %p280 = scmp.lt.s32.totalorder %s18, 3
      %p281 = pnand %p279, %p280
      %p282 = pneg %p281
      // Predicated region
      $region45: #{tpu_custom_call.1} parent=5 // pred_check
        _
      $region46: #{tpu_custom_call.1} parent=5 // pred_check_branch
        %284 = sbr.rel (%p281) target = $region48
      $region47: #{tpu_custom_call.1} parent=5 // pred_region
        %s285 = ssub.s32 %s18, 1
        %s286 = smul.u32 2, %s28
        %p287 = scmp.lt.s32.totalorder %s27, 1
        %s288 = scalar_select %p287, %s27, 1
        %p289 = scmp.lt.s32.totalorder %s286, 1
        %s290 = scalar_select %p289, %s286, 1
        %s291 = smul.addr %s288, 2
        %s292 = sadd.s32 %s290, %s291
        %s293 = smul.addr %s292, 4
        %s294 = scalar_lea.vmem %s0, %s293
        %p295 = pneg %p58
        %p296 = pneg %p55
        %s297 = smul.u32 2, %s28
        %p298 = scmp.lt.s32.totalorder %s27, 1
        %s299 = scalar_select %p298, %s27, 1
        %p300 = scmp.lt.s32.totalorder %s297, 1
        %s301 = scalar_select %p300, %s297, 1
        %s302 = smul.addr %s299, 2
        %s303 = sadd.s32 %s301, %s302
        %s304 = smul.addr %s303, 4
        %s305 = scalar_lea.vmem %s1, %s304
        %p306 = pneg %p86
        %p307 = pneg %p83
        %p308 = pneg %p107
        %p309 = pneg %p104
        %p310 = pneg %p128
        %p311 = pneg %p125
        %p312 = pneg %p149
        %p313 = pneg %p146
        %p314 = pneg %p170
        %p315 = pneg %p167
        %p316 = pneg %p191
        %p317 = pneg %p188
        %p318 = pneg %p219
        %p319 = pneg %p216
        %s320 = sand.u32 %s206, 1
        %s321 = scalar_lea.sflag [#allocation4], %s320
        %s322 = sand.u32 %s206, 1
        %s323 = smul.addr %s322, 8
        %s324 = scalar_lea.vmem [#allocation3], %s323
        %s325 = smul.u32 2, %s28
        %p326 = scmp.lt.s32.totalorder %s27, 1
        %s327 = scalar_select %p326, %s27, 1
        %p328 = scmp.lt.s32.totalorder %s325, 1
        %s329 = scalar_select %p328, %s325, 1
        %s330 = smul.addr %s327, 2
        %s331 = sadd.s32 %s329, %s330
        %s332 = smul.addr %s331, 4
        %s333 = scalar_lea.vmem %s0, %s332
        %s334 = smul.u32 2, %s28
        %s335 = smul.u32 2, %s28
        %p336 = scmp.lt.s32.totalorder %s27, 1
        %s337 = scalar_select %p336, %s27, 1
        %p338 = scmp.lt.s32.totalorder %s335, 1
        %s339 = scalar_select %p338, %s335, 1
        %s340 = smul.addr %s337, 2
        %s341 = sadd.s32 %s339, %s340
        %s342 = smul.addr %s341, 4
        %s343 = scalar_lea.vmem %s1, %s342
        %s344 = smul.u32 2, %s28
        %s345 = smul.u32 2, %s28
        %v346 = vld [vmem:[%s2] sm:$0xff]
        %v347 = vld [vmem:[%s3] sm:$0xff]
        %v348 = vld [vmem:[%s333] ss:$4 sm:$0x3]
        %v350 = vlaneseq
        %v351 = vshrl.u32 %v350, 7
        %v352 = vsub.s32 0, %v351
        %v353 = vrot.slane %v348, %v352
        %v354 = vlaneseq
        %v355 = vshrl.u32 %v354, 7
        %v356 = vsub.s32 1, %v355
        %v357 = vrot.slane %v348, %v356
        %361 = vset.pattern.permute.xlu0 0
        %362 = vperm.xlu0 %361, %v346
        %v363 = vpop.permute.xlu0 %362
        %v365 = vmul.f32 %v363, %v353
        %v366 = vmul.f32 %v363, %v357
        %s367 = scalar_lea.vmem %s333, 1
        %v368 = vld [vmem:[%s367] ss:$4 sm:$0x3]
        %v370 = vlaneseq
        %v371 = vshrl.u32 %v370, 7
        %v372 = vsub.s32 0, %v371
        %v373 = vrot.slane %v368, %v372
        %v374 = vlaneseq
        %v375 = vshrl.u32 %v374, 7
        %v376 = vsub.s32 1, %v375
        %v377 = vrot.slane %v368, %v376
        %380 = vset.pattern.permute.xlu0 1
        %381 = vperm.xlu0 %380, %v346
        %v382 = vpop.permute.xlu0 %381
        %v384 = vmul.f32 %v382, %v373
        %v385 = vmul.f32 %v382, %v377
        %v386 = vadd.f32 %v365, %v384
        %v387 = vadd.f32 %v366, %v385
        %s388 = scalar_lea.vmem %s333, 2
        %v389 = vld [vmem:[%s388] ss:$4 sm:$0x3]
        %v391 = vlaneseq
        %v392 = vshrl.u32 %v391, 7
        %v393 = vsub.s32 0, %v392
        %v394 = vrot.slane %v389, %v393
        %v395 = vlaneseq
        %v396 = vshrl.u32 %v395, 7
        %v397 = vsub.s32 1, %v396
        %v398 = vrot.slane %v389, %v397
        %401 = vset.pattern.permute.xlu0 2
        %402 = vperm.xlu0 %401, %v346
        %v403 = vpop.permute.xlu0 %402
        %v405 = vmul.f32 %v403, %v394
        %v406 = vmul.f32 %v403, %v398
        %v407 = vadd.f32 %v386, %v405
        %v408 = vadd.f32 %v387, %v406
        %s409 = scalar_lea.vmem %s333, 3
        %v410 = vld [vmem:[%s409] ss:$4 sm:$0x3]
        %v412 = vlaneseq
        %v413 = vshrl.u32 %v412, 7
        %v414 = vsub.s32 0, %v413
        %v415 = vrot.slane %v410, %v414
        %v416 = vlaneseq
        %v417 = vshrl.u32 %v416, 7
        %v418 = vsub.s32 1, %v417
        %v419 = vrot.slane %v410, %v418
        %422 = vset.pattern.permute.xlu0 3
        %423 = vperm.xlu0 %422, %v346
        %v424 = vpop.permute.xlu0 %423
        %v426 = vmul.f32 %v424, %v415
        %v427 = vmul.f32 %v424, %v419
        %v428 = vadd.f32 %v407, %v426
        %v429 = vadd.f32 %v408, %v427
        %v430 = vld [vmem:[%s343] ss:$4 sm:$0x3]
        %v432 = vlaneseq
        %v433 = vshrl.u32 %v432, 7
        %v434 = vsub.s32 0, %v433
        %v435 = vrot.slane %v430, %v434
        %v436 = vlaneseq
        %v437 = vshrl.u32 %v436, 7
        %v438 = vsub.s32 1, %v437
        %v439 = vrot.slane %v430, %v438
        %443 = vset.pattern.permute.xlu0 0
        %444 = vperm.xlu0 %443, %v347
        %v445 = vpop.permute.xlu0 %444
        %v447 = vmul.f32 %v445, %v435
        %v448 = vmul.f32 %v445, %v439
        %v449 = vadd.f32 %v428, %v447
        %v450 = vadd.f32 %v429, %v448
        %s451 = scalar_lea.vmem %s343, 1
        %v452 = vld [vmem:[%s451] ss:$4 sm:$0x3]
        %v454 = vlaneseq
        %v455 = vshrl.u32 %v454, 7
        %v456 = vsub.s32 0, %v455
        %v457 = vrot.slane %v452, %v456
        %v458 = vlaneseq
        %v459 = vshrl.u32 %v458, 7
        %v460 = vsub.s32 1, %v459
        %v461 = vrot.slane %v452, %v460
        %464 = vset.pattern.permute.xlu0 1
        %465 = vperm.xlu0 %464, %v347
        %v466 = vpop.permute.xlu0 %465
        %v468 = vmul.f32 %v466, %v457
        %v469 = vmul.f32 %v466, %v461
        %v470 = vadd.f32 %v449, %v468
        %v471 = vadd.f32 %v450, %v469
        %s472 = scalar_lea.vmem %s343, 2
        %v473 = vld [vmem:[%s472] ss:$4 sm:$0x3]
        %v475 = vlaneseq
        %v476 = vshrl.u32 %v475, 7
        %v477 = vsub.s32 0, %v476
        %v478 = vrot.slane %v473, %v477
        %v479 = vlaneseq
        %v480 = vshrl.u32 %v479, 7
        %v481 = vsub.s32 1, %v480
        %v482 = vrot.slane %v473, %v481
        %485 = vset.pattern.permute.xlu0 2
        %486 = vperm.xlu0 %485, %v347
        %v487 = vpop.permute.xlu0 %486
        %v489 = vmul.f32 %v487, %v478
        %v490 = vmul.f32 %v487, %v482
        %v491 = vadd.f32 %v470, %v489
        %v492 = vadd.f32 %v471, %v490
        %s493 = scalar_lea.vmem %s343, 3
        %v494 = vld [vmem:[%s493] ss:$4 sm:$0x3]
        %v496 = vlaneseq
        %v497 = vshrl.u32 %v496, 7
        %v498 = vsub.s32 0, %v497
        %v499 = vrot.slane %v494, %v498
        %v500 = vlaneseq
        %v501 = vshrl.u32 %v500, 7
        %v502 = vsub.s32 1, %v501
        %v503 = vrot.slane %v494, %v502
        %506 = vset.pattern.permute.xlu0 3
        %507 = vperm.xlu0 %506, %v347
        %v508 = vpop.permute.xlu0 %507
        %v510 = vmul.f32 %v508, %v499
        %v511 = vmul.f32 %v508, %v503
        %v512 = vadd.f32 %v491, %v510
        %v513 = vadd.f32 %v492, %v511
        %v514 = vld [vmem:[%s4] sm:$0xff]
        %516 = vset.pattern.permute.xlu0 0
        %517 = vperm.xlu0 %516, %v514
        %v518 = vpop.permute.xlu0 %517
        %v520 = vadd.f32 %v512, %v518
        %v521 = vadd.f32 %v513, %v518
        %v522 = vmax.f32 %v520, 0.0
        %v523 = vmax.f32 %v521, 0.0
        %v524 = vld [vmem:[%s5] sm:$0xff]
        %526 = vset.pattern.permute.xlu0 0
        %527 = vperm.xlu0 %526, %v524
        %v528 = vpop.permute.xlu0 %527
        %v530 = vmul.f32 %v522, %v528
        %v531 = vmul.f32 %v523, %v528
        %v532 = vrot.slane %v530, 4
        %v533 = vadd.f32 %v530, %v532
        %v534 = vrot.slane %v533, 2
        %v535 = vadd.f32 %v533, %v534
        %v536 = vrot.slane %v535, 1
        %v537 = vadd.f32 %v535, %v536
        %v538 = vrot.slane %v531, 4
        %v539 = vadd.f32 %v531, %v538
        %v540 = vrot.slane %v539, 2
        %v541 = vadd.f32 %v539, %v540
        %v542 = vrot.slane %v541, 1
        %v543 = vadd.f32 %v541, %v542
        %v544 = vld [vmem:[#allocation2] sm:$0x1]
        %546 = vset.pattern.permute.xlu0 0
        %547 = vperm.xlu0 %546, %v544
        %v548 = vpop.permute.xlu0 %547
        %v550 = vlaneseq
        %v551 = vshrl.u32 %v550, 7
        %v552 = vsub.s32 0, %v551
        %v553 = vrot.slane %v548, %v552
        %v554 = vadd.f32 %v537, %v553
        %v555 = vadd.f32 %v543, %v553
        %v556 = vmul.f32 %v554, 0.5
        %v557 = vmul.f32 %v555, 0.5
        %v558 = vtanh.pop %v556
        %v559 = vtanh.pop %v557
        %v560 = vmul.f32 %v558, 0.5
        %v561 = vmul.f32 %v559, 0.5
        %v562 = vadd.f32 %v560, 0.5
        %v563 = vadd.f32 %v561, 0.5
        %v564 = vld [vmem:[%s343] sm:$0xff]
        %v567 = vcombine.low %v562, %v563
        %v569 = vmul.f32 %v564, %v567
        %570 = vst [vmem:[%s324] sm:$0xff] %v569
        %s571 = sand.u32 %s206, 1
        %s572 = scalar_lea.sflag [#allocation4], %s571
        %s573 = sand.u32 %s206, 1
        %s574 = smul.addr %s573, 8
        %s575 = scalar_lea.vmem [#allocation3], %s574
        // Predicated region
        $region49: #{tpu_custom_call.1} parent=47 // pred_check
          %p576 = pneg %p216
        $region50: #{tpu_custom_call.1} parent=47 // pred_check_branch
          %578 = sbr.rel (%p576) target = $region52
        $region51: #{tpu_custom_call.1} parent=47 // pred_region
          %s579 = smul.u32 2, %s28
          %s581 = ssub.s32 128, 128
          %582 = vsyncadd %s572, %s581
          %s583 = smul.addr %s27, 2
          %s584 = sadd.s32 %s579, %s583
          %s585 = smul.addr %s584, 64
          %s586 = scalar_lea.hbm %s7, %s585
          %s588 = sshll.u32 %s575, 4
          %s589 = int_to_ptr.vmem [resolvable:$true] %s588
          %591 = dma.vmem_to_hbm [thread:$0]  %s589, 128, %s586, %s572
        $region52: #{tpu_custom_call.1} parent=47 // pred_fallthru
          _
      $region48: #{tpu_custom_call.1} parent=5 // pred_fallthru
        _
      %p592 = scmp.le.s32.totalorder 2, %s18
      // Predicated region
      $region53: #{tpu_custom_call.1} parent=5 // pred_check
        %p593 = pneg %p592
      $region54: #{tpu_custom_call.1} parent=5 // pred_check_branch
        %595 = sbr.rel (%p593) target = $region56
      $region55: #{tpu_custom_call.1} parent=5 // pred_region
        %s596 = ssub.s32 %s18, 2
        // Predicated region
        $region57: #{tpu_custom_call.1} parent=55 // pred_check
          %p597 = pneg %p222
        $region58: #{tpu_custom_call.1} parent=55 // pred_check_branch
          %599 = sbr.rel (%p597) target = $region60
        $region59: #{tpu_custom_call.1} parent=55 // pred_region
          %s600 = sand.u32 %s207, 1
          %s601 = scalar_lea.sflag [#allocation4], %s600
          %s602 = sand.u32 %s207, 1
          %s603 = smul.addr %s602, 8
          %s604 = scalar_lea.vmem [#allocation3], %s603
          %605 = dma.done %s601, 128
        $region60: #{tpu_custom_call.1} parent=55 // pred_fallthru
          _
      $region56: #{tpu_custom_call.1} parent=5 // pred_fallthru
        _
    $region6: #{tpu_custom_call.1} parent=1 // loop_footer
      %s22 = sadd.s32 1, %s18
    $region7: #{tpu_custom_call.1} parent=1 // loop_footer_branch
      %17 = sbr.rel target = $region3
    $region8: #{tpu_custom_call.1} parent=1 // loop_exit
      _
    %606 = vsyncpa [#allocation4], 1
    %s607 = scalar_lea.sflag [#allocation4], 1
    %608 = vsyncpa %s607, 1

</llo_original>
